<compile_context>
chip_gen: v7x
topology: tpu7x:2x2x1
jax: 0.10.0
libtpu: 0.0.40
codegen_flags: <defaults>
</compile_context>

<pallas_src>
import functools

import jax
import jax.numpy as jnp
from jax.experimental import pallas as pl
from jax.experimental.pallas import tpu as pltpu


_LANES = 128
_TARGET_TILE_BYTES = 2 * 1024 * 1024     # ~2 MiB per block (per buffer)
_MAX_BLOCK_ROWS = 1024
_PALLAS_MIN_BYTES = 1 << 20              # auto-dispatch threshold (1 MiB)


def _clamp_kernel(x_ref, o_ref, *, lo, hi):
    """Elementwise clamp of one (block_rows, width) VMEM tile."""
    o_ref[...] = jnp.minimum(jnp.maximum(x_ref[...], lo), hi)


def _choose_layout(n_elems, itemsize):
    """Pick (width, rows, block_rows) for a lane-dense 2-D slab."""
    # Lane axis: widest of {1024, 512, 256, 128} that still gives >= 8 rows.
    width = _LANES
    for w in (1024, 512, 256):
        if n_elems >= w * 8:
            width = w
            break
    rows = pl.cdiv(n_elems, width)
    # ~2 MiB tiles, multiple of 8 sublanes.
    target_rows = max(8, (_TARGET_TILE_BYTES // (width * itemsize)) // 8 * 8)
    target_rows = min(target_rows, _MAX_BLOCK_ROWS)
    if rows <= target_rows:
        # Single block covering the whole slab; block dim == array dim, so the
        # (8,128) divisibility rule does not apply and no row padding is needed.
        block_rows = rows
    else:
        # Multi-block grid; block_rows is a multiple of 8, the last (possibly
        # partial) block is handled by Pallas's masking.
        block_rows = target_rows
    return width, rows, block_rows


@functools.partial(jax.jit, static_argnames=("min", "max", "use_pallas"))
def pallas_clip(x, min, max, use_pallas=None):
    """Pallas-backed equivalent of torch.clamp(x, min, max).

    use_pallas: True / False / None.  None = auto: only dispatch to the Pallas
    kernel above ~1 MiB, since a fused XLA clip beats any custom kernel on
    tiny tensors (pure launch/DMA-setup overhead).
    """
    lo, hi = float(min), float(max)

    n = x.size
    nbytes = n * x.dtype.itemsize
    if use_pallas is None:
        use_pallas = nbytes >= _PALLAS_MIN_BYTES
    if (not use_pallas) or n == 0:
        return jnp.clip(x, lo, hi)

    width, rows, block_rows = _choose_layout(n, x.dtype.itemsize)
    padded = rows * width

    # Flatten (contiguous, free) to a lane-dense slab; pad only the sub-row
    # tail (at most width-1 elements) if the size is not a multiple of width.
    x_flat = x.reshape(-1)
    if padded != n:
        x_flat = jnp.pad(x_flat, (0, padded - n))
    x2d = x_flat.reshape(rows, width)

    out2d = pl.pallas_call(
        functools.partial(_clamp_kernel, lo=lo, hi=hi),
        out_shape=jax.ShapeDtypeStruct((rows, width), x.dtype),
        grid=(pl.cdiv(rows, block_rows),),
        in_specs=[pl.BlockSpec((block_rows, width), lambda i: (i, 0))],
        out_specs=pl.BlockSpec((block_rows, width), lambda i: (i, 0)),
        compiler_params=pltpu.CompilerParams(
            dimension_semantics=("parallel",)),
        input_output_aliases={0: 0},
    )(x2d)

    out_flat = out2d.reshape(-1)
    if padded != n:
        out_flat = out_flat[:n]
    return out_flat.reshape(x.shape)


class WrapFunction:
    """JAX analogue of mmdeploy's WrapFunction nn.Module.

    Stores a wrapped callable plus fixed kwargs; forward() merges call-time
    kwargs with the stored ones (stored kwargs take precedence, matching the
    original `kwargs.update(self.kwargs)`) and dispatches to the wrapped
    function.
    """

    def __init__(self, wrapped_function, **kwargs):
        self.wrapped_function = wrapped_function
        self.kwargs = kwargs

    def forward(self, *args, **kwargs):
        """Call the wrapped function."""
        kwargs.update(self.kwargs)
        return self.wrapped_function(*args, **kwargs)

    __call__ = forward


if __name__ == "__main__":
    root = jax.random.PRNGKey(0)
    k1, k2 = jax.random.split(root)

    # NCHW input matching the docstring clamp example.
    x = jax.random.normal(k1, (2, 4, 16, 16), dtype=jnp.float32)

    # WrapFunction stores the clamp bounds as fixed kwargs (partial-function
    # behaviour).  use_pallas=True forces the Pallas path for this small demo
    # input (auto-dispatch would otherwise use fused jnp.clip below 1 MiB).
    wrapped_model = WrapFunction(pallas_clip, min=-0.5, max=0.5, use_pallas=True)
    out = jax.block_until_ready(wrapped_model(x))

    ref = jnp.clip(x, -0.5, 0.5)
    assert out.shape == x.shape and out.dtype == x.dtype
    assert bool(jnp.allclose(out, ref)), "Pallas clamp mismatch vs reference"

    # Exercise the padded / remainder path (size not a multiple of 128), and
    # check that stored kwargs override call-time kwargs like the original.
    x2 = jax.random.normal(k2, (3, 5, 7), dtype=jnp.float32)
    out2 = jax.block_until_ready(
        wrapped_model(x2, min=-0.25, max=0.25))   # stored -0.5/0.5 win
    assert bool(jnp.allclose(out2, jnp.clip(x2, -0.5, 0.5))), \
        "Pallas clamp mismatch vs reference (padded path / kwargs merge)"

    print("KERNEL_OK")
</pallas_src>

<mosaic_0001>
module attributes {stable_mosaic.version = 11 : i64} {
  func.func @_clamp_kernel(%arg0: i32, %arg1: memref<8x256xf32, #tpu.memory_space<vmem>>, %arg2: memref<8x256xf32, #tpu.memory_space<vmem>>) attributes {dimension_semantics = [#tpu.dimension_semantics<parallel>], iteration_bounds = array<i64: 1>, scalar_prefetch = 0 : i64, scratch_operands = 0 : i64, tpu.core_type = #tpu.core_type<tc>, window_params = [{transform_indices = @transform_0, window_bounds = array<i64: 8, 256>}, {transform_indices = @transform_1, window_bounds = array<i64: 8, 256>}]} {
    %c0 = arith.constant 0 : index
    %c0_0 = arith.constant 0 : index
    %0 = vector.load %arg1[%c0, %c0_0] : memref<8x256xf32, #tpu.memory_space<vmem>>, vector<8x256xf32>
    %cst = arith.constant -5.000000e-01 : f32
    %1 = vector.broadcast %cst : f32 to vector<8x256xf32>
    %2 = arith.maximumf %0, %1 : vector<8x256xf32>
    %cst_1 = arith.constant 5.000000e-01 : f32
    %3 = vector.broadcast %cst_1 : f32 to vector<8x256xf32>
    %4 = arith.minimumf %2, %3 : vector<8x256xf32>
    %c0_2 = arith.constant 0 : index
    %c0_3 = arith.constant 0 : index
    %5 = vector.load %arg2[%c0_2, %c0_3] : memref<8x256xf32, #tpu.memory_space<vmem>>, vector<8x256xf32>
    tpu.vector_store %arg2[%c0_2, %c0_3], %4 {strides = array<i32>} : memref<8x256xf32, #tpu.memory_space<vmem>>, vector<8x256xf32>,
    return
  }
  func.func @transform_0(%arg0: i32) -> (i32, i32) {
    %c0_i32 = arith.constant 0 : i32
    %c0_i32_0 = arith.constant 0 : i32
    return %arg0, %c0_i32 : i32, i32
  }
  func.func @transform_1(%arg0: i32) -> (i32, i32) {
    %c0_i32 = arith.constant 0 : i32
    %c0_i32_0 = arith.constant 0 : i32
    return %arg0, %c0_i32 : i32, i32
  }
}

</mosaic_0001>

<llo_original>
// kernel: pallas_clip.1
$region0: #{pallas_clip.1}
  #allocation0 [shape = 'u32[]', space=smem, size = 0x4, offset = 0x4, fixed_abs, tag = 'smem constant byte address 0x4 - core index']
  #allocation1 [shape = 'u32[144,128]{1,0:T(1,128)}', space=vmem, size = 0x12000, scoped, tag = 'internal scratch']
  %s0 = inlined_call_operand.vmem [shape: f32[8,256], index: 0, kind: input, shape index: {}, may-alias: {0,1}]
  %s1 = inlined_call_operand.vmem [shape: f32[8,256], index: 1, kind: output, shape index: {}, may-alias: {0,1}]
  %s2 = sld [smem:[#allocation0]]
  $region14: #{pallas_clip.1} parent=0
    _
  %s4 = ssub.s32 1, %s2
  %s5 = scalar_select 0, %s4, %s2
  // Predicated region
  $region2: #{pallas_clip.1} parent=0 // pred_check
    _
  $region3: #{pallas_clip.1} parent=0 // pred_check_branch
    %7 = sbr.rel (0) target = $region5
  $region4: #{pallas_clip.1} parent=0 // pred_region
    _
  $region5: #{pallas_clip.1} parent=0 // pred_fallthru
    _
  %v8 = vld [vmem:[%s0] sm:$0xff]
  %v9 = vld [vmem:[%s0 + $0x8] sm:$0xff]
  %v10 = vmax.f32 %v8, -0.5
  %v11 = vmax.f32 %v9, -0.5
  %v12 = vmin.f32 %v10, 0.5
  %v13 = vmin.f32 %v11, 0.5
  %14 = vst [vmem:[%s1] sm:$0xff] %v12
  %15 = vst [vmem:[%s1 + $0x8] sm:$0xff] %v13
  // Predicated region
  $region6: #{pallas_clip.1} parent=0 // pred_check
    _
  $region7: #{pallas_clip.1} parent=0 // pred_check_branch
    %17 = sbr.rel (0) target = $region9
  $region8: #{pallas_clip.1} parent=0 // pred_region
    _
  $region9: #{pallas_clip.1} parent=0 // pred_fallthru
    _
  // Predicated region
  $region10: #{pallas_clip.1} parent=0 // pred_check
    _
  $region11: #{pallas_clip.1} parent=0 // pred_check_branch
    %19 = sbr.rel (0) target = $region13
  $region12: #{pallas_clip.1} parent=0 // pred_region
    _
  $region13: #{pallas_clip.1} parent=0 // pred_fallthru
    _

</llo_original>
